<compile_context>
chip_gen: v6e
topology: v6e:2x2x1
jax: 0.10.0
libtpu: 0.0.40
codegen_flags: <defaults>
</compile_context>

<pallas_src>
import functools

import jax
import jax.numpy as jnp
from jax import lax
from jax.experimental import pallas as pl
from jax.experimental.pallas import tpu as pltpu


def _round_up(x, m):
  return (x + m - 1) // m * m


@functools.lru_cache(maxsize=1)
def _roll_dir():
  """Empirically pin down pltpu.roll's rotation direction (+1 == jnp.roll).

  A one-off tiny kernel; makes the depthwise shift math robust to either
  rotation convention of the underlying tpu.rotate op.
  """
  def k(x_ref, o_ref):
    o_ref[...] = pltpu.roll(x_ref[...], 3, axis=1)

  x = jnp.tile(jnp.arange(16, dtype=jnp.float32).reshape(1, 16, 1),
               (2, 1, 128))
  out = pl.pallas_call(
      k, out_shape=jax.ShapeDtypeStruct(x.shape, x.dtype))(x)
  return 1 if bool(jnp.allclose(out, jnp.roll(x, 3, axis=1))) else -1


# ----------------------------------------------------------------------------
# Pallas kernel: one batch element per grid step, full spatial extent in VMEM.
# ----------------------------------------------------------------------------
def _inverted_residual_kernel(
    x_ref, w1_ref, b1_ref, dw_ref, b2_ref, w3_ref, b3_ref, o_ref, hp_ref,
    *, H, W, Cin, Cmid, Cout, K, S, P, Ho, Wo, Wp, apply_residual, roll_dir):
  Hp = H + 2 * P
  x = x_ref[0]                                       # (H, W, Cin) f32

  # --- 1x1 expansion conv (BN scale pre-folded into w1) + bias + ReLU -------
  # bf16 operands feed the MXU; accumulation stays f32.
  h = jnp.dot(x.reshape(H * W, Cin).astype(jnp.bfloat16), w1_ref[...],
              preferred_element_type=jnp.float32)    # (H*W, Cmid)
  h = jnp.maximum(h + b1_ref[...], 0.0)

  # --- stage into the zero-framed scratch -----------------------------------
  #   rows [0,P) and [P+H,Hp)   : zeros (top/bottom 'same' padding)
  #   cols [W,Wp)               : zeros (wrap-around source for the W taps)
  #   rows [P,P+H) x cols [0,W) : data  (full-width, sublane-aligned store)
  # Only the small zero frame is rewritten each step (megacore-safe).
  if P > 0:
    hp_ref[0:P, :, :] = jnp.zeros((P, Wp, Cmid), jnp.float32)
    hp_ref[P + H:Hp, :, :] = jnp.zeros((P, Wp, Cmid), jnp.float32)
  if Wp > W:
    hp_ref[:, W:Wp, :] = jnp.zeros((Hp, Wp - W, Cmid), jnp.float32)
  hp_ref[P:P + H, 0:W, :] = h.reshape(H, W, Cmid)
  hp = hp_ref[...]                                   # (Hp, Wp, Cmid)

  # --- depthwise KxK conv (BN scale pre-folded into dw) ---------------------
  # dy taps: slices along the leading (non-tile) axis -> cheap.
  # dx taps: XLU rotations along W; the wrap-around picks up the zero columns
  #          so the 'same'-padding zeros come for free (no masks, no relayout).
  acc = jnp.zeros((Ho, Wp, Cmid), jnp.float32)
  for dy in range(K):
    rows = hp[dy:dy + (Ho - 1) * S + 1:S]            # (Ho, Wp, Cmid)
    for dx in range(K):
      d = dx - P
      if d == 0:
        tap = rows
      else:
        tap = pltpu.roll(rows, (-roll_dir * d) % Wp, axis=1)
      acc = acc + tap * dw_ref[dy, dx, :]
  acc = acc[:, 0:(Wo - 1) * S + 1:S, :]              # (Ho, Wo, Cmid)
  a2 = jnp.maximum(acc.reshape(Ho * Wo, Cmid) + b2_ref[...], 0.0)

  # --- 1x1 projection conv (BN scale pre-folded) + bias (+ residual) --------
  out = jnp.dot(a2.astype(jnp.bfloat16), w3_ref[...],
                preferred_element_type=jnp.float32)  # (Ho*Wo, Cout)
  out = (out + b3_ref[...]).reshape(Ho, Wo, Cout)
  if apply_residual:
    out = out + x
  o_ref[0] = out.astype(o_ref.dtype)


# ----------------------------------------------------------------------------
# Host wrapper
# ----------------------------------------------------------------------------
def inverted_residual_pallas(x_nhwc, params, *, kernel_size, stride,
                             apply_residual):
  N, H, W, Cin = x_nhwc.shape
  w1, s1, b1, wdw, s2, b2, w3, s3, b3 = params
  Cmid = w1.shape[1]
  Cout = w3.shape[1]
  K, S = kernel_size, stride
  P = (K - 1) // 2
  Ho = (H + 2 * P - K) // S + 1
  Wo = (W + 2 * P - K) // S + 1
  Wp = _round_up(W + 2 * P, 8)          # sublane-aligned padded width

  # Fold the inference-mode BN scales into the conv weights (host side); only
  # the bias adds remain in the kernel.  Matmul weights are pre-cast to bf16.
  w1f = (w1 * s1).astype(jnp.bfloat16)                        # (Cin, Cmid)
  dwf = (wdw * s2.reshape(1, 1, Cmid)).astype(jnp.float32)    # (K, K, Cmid)
  w3f = (w3 * s3).astype(jnp.bfloat16)                        # (Cmid, Cout)

  kernel = functools.partial(
      _inverted_residual_kernel,
      H=H, W=W, Cin=Cin, Cmid=Cmid, Cout=Cout,
      K=K, S=S, P=P, Ho=Ho, Wo=Wo, Wp=Wp,
      apply_residual=apply_residual, roll_dir=_roll_dir())

  rep = lambda nd: (lambda n: (0,) * nd)   # replicated-operand index maps

  return pl.pallas_call(
      kernel,
      out_shape=jax.ShapeDtypeStruct((N, Ho, Wo, Cout), x_nhwc.dtype),
      grid_spec=pltpu.PrefetchScalarGridSpec(
          num_scalar_prefetch=0,
          grid=(N,),
          in_specs=[
              pl.BlockSpec((1, H, W, Cin), lambda n: (n, 0, 0, 0)),
              pl.BlockSpec((Cin, Cmid), rep(2)),
              pl.BlockSpec((1, Cmid), rep(2)),
              pl.BlockSpec((K, K, Cmid), rep(3)),
              pl.BlockSpec((1, Cmid), rep(2)),
              pl.BlockSpec((Cmid, Cout), rep(2)),
              pl.BlockSpec((1, Cout), rep(2)),
          ],
          out_specs=pl.BlockSpec((1, Ho, Wo, Cout), lambda n: (n, 0, 0, 0)),
          scratch_shapes=[pltpu.VMEM((H + 2 * P, Wp, Cmid), jnp.float32)],
      ),
      compiler_params=pltpu.CompilerParams(
          dimension_semantics=("parallel",)),
  )(x_nhwc, w1f, b1, dwf, b2, w3f, b3)


# ----------------------------------------------------------------------------
# Pure-JAX reference (f32, true module semantics) for the correctness check
# ----------------------------------------------------------------------------
def inverted_residual_ref(x_nhwc, params, *, kernel_size, stride,
                          apply_residual):
  w1, s1, b1, wdw, s2, b2, w3, s3, b3 = params
  Cmid = w1.shape[1]
  P = (kernel_size - 1) // 2
  h = jnp.einsum('nhwc,cm->nhwm', x_nhwc, w1)
  h = jax.nn.relu(h * s1 + b1)
  h = lax.conv_general_dilated(
      h, wdw.reshape(kernel_size, kernel_size, 1, Cmid),
      window_strides=(stride, stride), padding=[(P, P), (P, P)],
      dimension_numbers=('NHWC', 'HWIO', 'NHWC'),
      feature_group_count=Cmid)
  h = jax.nn.relu(h * s2 + b2)
  o = jnp.einsum('nhwc,co->nhwo', h, w3) * s3 + b3
  if apply_residual:
    o = o + x_nhwc
  return o


def _fold_bn(gamma, beta, mean, var, eps=1e-5):
  scale = gamma / jnp.sqrt(var + eps)
  bias = beta - mean * scale
  return scale.reshape(1, -1), bias.reshape(1, -1)


if __name__ == "__main__":
  # Module hyper-parameters (small, residual branch active).
  in_ch, out_ch = 8, 8
  kernel_size, stride, expansion = 3, 1, 4
  mid_ch = in_ch * expansion
  apply_residual = (in_ch == out_ch) and (stride == 1)

  N, H, W = 2, 16, 16
  key = jax.random.PRNGKey(0)
  keys = jax.random.split(key, 8)

  # Input, PyTorch convention NCHW, then moved to the kernel's NHWC layout.
  x_nchw = jax.random.normal(keys[0], (N, in_ch, H, W), jnp.float32)
  x_nhwc = jnp.transpose(x_nchw, (0, 2, 3, 1))

  # Conv weights (PyTorch shapes), deterministically initialized.
  w1_t = jax.random.normal(keys[1], (mid_ch, in_ch, 1, 1), jnp.float32) * 0.2
  wdw_t = jax.random.normal(keys[2], (mid_ch, 1, kernel_size, kernel_size),
                            jnp.float32) * 0.2
  w3_t = jax.random.normal(keys[3], (out_ch, mid_ch, 1, 1), jnp.float32) * 0.2

  # Kernel-layout weights.
  w1 = jnp.transpose(w1_t[:, :, 0, 0], (1, 0))              # (in, mid)
  wdw = jnp.transpose(wdw_t[:, 0, :, :], (1, 2, 0))          # (k, k, mid)
  w3 = jnp.transpose(w3_t[:, :, 0, 0], (1, 0))              # (mid, out)

  # BatchNorm (eval/inference mode), folded into per-channel scale/bias.
  def bn_params(k, c):
    ks = jax.random.split(k, 4)
    gamma = 1.0 + 0.1 * jax.random.normal(ks[0], (c,), jnp.float32)
    beta = 0.1 * jax.random.normal(ks[1], (c,), jnp.float32)
    mean = 0.1 * jax.random.normal(ks[2], (c,), jnp.float32)
    var = jnp.abs(jax.random.normal(ks[3], (c,), jnp.float32)) + 0.5
    return _fold_bn(gamma, beta, mean, var)

  s1, b1 = bn_params(keys[4], mid_ch)
  s2, b2 = bn_params(keys[5], mid_ch)
  s3, b3 = bn_params(keys[6], out_ch)

  params = (w1, s1, b1, wdw, s2, b2, w3, s3, b3)

  out = inverted_residual_pallas(
      x_nhwc, params, kernel_size=kernel_size, stride=stride,
      apply_residual=apply_residual)
  out = jax.block_until_ready(out)

  ref = inverted_residual_ref(
      x_nhwc, params, kernel_size=kernel_size, stride=stride,
      apply_residual=apply_residual)

  assert out.shape == ref.shape, (out.shape, ref.shape)
  err = float(jnp.max(jnp.abs(out - ref)))
  # bf16 matmul operands (f32 accumulation) vs. a pure-f32 reference:
  # expected max deviation ~1e-2; any real indexing/roll/BN-fold bug is O(0.1+).
  assert jnp.allclose(out, ref, atol=3e-2, rtol=3e-2), err

  print("KERNEL_OK")
</pallas_src>

<mosaic_0001>
module attributes {stable_mosaic.version = 11 : i64} {
  func.func @k(%arg0: memref<2x16x128xf32, #tpu.memory_space<vmem>>, %arg1: memref<2x16x128xf32, #tpu.memory_space<vmem>>) attributes {dimension_semantics = [], scalar_prefetch = 0 : i64, scratch_operands = 0 : i64, tpu.core_type = #tpu.core_type<tc>} {
    %c0 = arith.constant 0 : index
    %c0_0 = arith.constant 0 : index
    %c0_1 = arith.constant 0 : index
    %0 = vector.load %arg0[%c0, %c0_0, %c0_1] : memref<2x16x128xf32, #tpu.memory_space<vmem>>, vector<2x16x128xf32>
    %c3_i32 = arith.constant 3 : i32
    %1 = tpu.dynamic_rotate %0 by %c3_i32 dim 1 : vector<2x16x128xf32>, i32 -> vector<2x16x128xf32>
    %c0_2 = arith.constant 0 : index
    %c0_3 = arith.constant 0 : index
    %c0_4 = arith.constant 0 : index
    %2 = vector.load %arg1[%c0_2, %c0_3, %c0_4] : memref<2x16x128xf32, #tpu.memory_space<vmem>>, vector<2x16x128xf32>
    tpu.vector_store %arg1[%c0_2, %c0_3, %c0_4], %1 {strides = array<i32>} : memref<2x16x128xf32, #tpu.memory_space<vmem>>, vector<2x16x128xf32>,
    return
  }
}

</mosaic_0001>

<llo_original>
// kernel: tpu_custom_call.1
$region0: #{tpu_custom_call.1}
  #allocation0 [shape = 'u32[]', space=smem, size = 0x4, offset = 0x4, fixed_abs, tag = 'smem constant byte address 0x4 - core index']
  #allocation1 [shape = 'u32[144,128]{1,0:T(1,128)}', space=vmem, size = 0x12000, scoped, tag = 'internal scratch']
  %s0 = inlined_call_operand.hbm [shape: f32[2,16,128], index: 0, kind: input, shape index: {}]
  %s1 = inlined_call_operand.hbm [shape: f32[2,16,128], index: 1, kind: output, shape index: {}]
  %s2 = sld [smem:[#allocation0]]
  $region18: #{tpu_custom_call.1} parent=0
    _
  %s4 = ssub.s32 1, %s2
  %s5 = scalar_select 0, %s4, %s2
  $region1: #{tpu_custom_call.1} parent=0
    #allocation2 [shape = 'u8[16384]{0}', space=vmem, size = 0x4000, scoped, tag = 'input window, operand 0, single buffered']
    #allocation3 [shape = 's32[1]{0}', space=sflag, size = 0x4, scoped, tag = 'scoped memory for tpu_custom_call.1']
    #allocation4 [shape = 's32[1]{0}', space=sflag, size = 0x4, scoped, tag = 'scoped memory for tpu_custom_call.1']
    #allocation5 [shape = 'u8[16384]{0}', space=vmem, size = 0x4000, scoped, tag = 'output window, operand 0, single buffered']
    %6 = vsyncpa [#allocation3], 0
    %7 = vsyncpa [#allocation4], 0
    // Predicated region
    $region2: #{tpu_custom_call.1} parent=1 // pred_check
      _
    $region3: #{tpu_custom_call.1} parent=1 // pred_check_branch
      %9 = sbr.rel (0) target = $region5
    $region4: #{tpu_custom_call.1} parent=1 // pred_region
      %s11 = ssub.s32 512, 512
      %12 = vsyncadd [#allocation3], %s11
      %s13 = sshll.u32 [#allocation2], 4
      %s14 = int_to_ptr.vmem [resolvable:$true] %s13
      %19 = dma.hbm_to_vmem [thread:$0]  %s0, 512, %s14, [#allocation3], 128, 128, 8
    $region5: #{tpu_custom_call.1} parent=1 // pred_fallthru
      _
    // Predicated region
    $region6: #{tpu_custom_call.1} parent=1 // pred_check
      _
    $region7: #{tpu_custom_call.1} parent=1 // pred_check_branch
      %21 = sbr.rel (0) target = $region9
    $region8: #{tpu_custom_call.1} parent=1 // pred_region
      %22 = dma.done [#allocation3], 512
    $region9: #{tpu_custom_call.1} parent=1 // pred_fallthru
      _
    %v23 = vld [vmem:[#allocation2] sm:$0xff]
    %v24 = vld [vmem:[#allocation2 + $0x8] sm:$0xff]
    %v25 = vld [vmem:[#allocation2 + $0x10] sm:$0xff]
    %v26 = vld [vmem:[#allocation2 + $0x18] sm:$0xff]
    %v27 = vrot.slane %v23, 5
    %v28 = vrot.slane %v25, 5
    %v29 = vrot.slane %v24, 5
    %v30 = vrot.slane %v26, 5
    %v31 = vlaneseq
    %v32 = vshrl.u32 %v31, 7
    %vm33 = vcmp.lt.s32.totalorder %v32, 3
    %v34 = vsel %vm33, %v27, %v29
    %v35 = vsel %vm33, %v28, %v30
    %v36 = vsel %vm33, %v29, %v27
    %v37 = vsel %vm33, %v30, %v28
    %38 = vst [vmem:[#allocation5] sm:$0xff] %v36
    %39 = vst [vmem:[#allocation5 + $0x8] sm:$0xff] %v34
    %40 = vst [vmem:[#allocation5 + $0x10] sm:$0xff] %v37
    %41 = vst [vmem:[#allocation5 + $0x18] sm:$0xff] %v35
    // Predicated region
    $region10: #{tpu_custom_call.1} parent=1 // pred_check
      _
    $region11: #{tpu_custom_call.1} parent=1 // pred_check_branch
      %43 = sbr.rel (0) target = $region13
    $region12: #{tpu_custom_call.1} parent=1 // pred_region
      %s45 = ssub.s32 512, 512
      %46 = vsyncadd [#allocation4], %s45
      %s47 = sshll.u32 [#allocation5], 4
      %s48 = int_to_ptr.vmem [resolvable:$true] %s47
      %53 = dma.vmem_to_hbm [thread:$0]  %s48, 512, %s1, [#allocation4], 128, 128, 8
    $region13: #{tpu_custom_call.1} parent=1 // pred_fallthru
      _
    // Predicated region
    $region14: #{tpu_custom_call.1} parent=1 // pred_check
      _
    $region15: #{tpu_custom_call.1} parent=1 // pred_check_branch
      %55 = sbr.rel (0) target = $region17
    $region16: #{tpu_custom_call.1} parent=1 // pred_region
      %56 = dma.done [#allocation4], 512
    $region17: #{tpu_custom_call.1} parent=1 // pred_fallthru
      _
    %57 = vsyncpa [#allocation3], 1
    %58 = vsyncpa [#allocation4], 1

</llo_original>
